<compile_context>
chip_gen: v6e
topology: v6e:2x2x1
jax: 0.10.0
libtpu: 0.0.40
codegen_flags: <defaults>
</compile_context>

<pallas_src>
import functools

import jax
import jax.numpy as jnp
import numpy as np
from jax.experimental import pallas as pl
from jax.experimental.pallas import tpu as pltpu


def _round_up(x: int, m: int) -> int:
    return ((x + m - 1) // m) * m


def _round_down(x: int, m: int) -> int:
    return (x // m) * m


def _pick_vmem_limit(vmem_limit_bytes=None) -> int:
    """VMEM limit derived from the actual chip (64 MiB v7x vs 128 MiB v5e/v6e)."""
    try:
        cap = int(pltpu.get_tpu_info().vmem_capacity_bytes)
    except Exception:
        cap = 64 * 1024 * 1024            # conservative (v7x-sized) fallback
    if vmem_limit_bytes is None:
        vmem_limit_bytes = cap // 2       # 32 MiB on v7x, 64 MiB on v5e/v6e
    return int(min(vmem_limit_bytes, cap))


def _choose_tile(m_padded: int, bytes_per_item: int, *, target: int, align: int,
                 budget: int, min_grid: int) -> int:
    """Largest `align`-multiple tile fitting `budget`, capped by `target`, and
    clamped so the 1-D grid keeps >= min_grid steps (megacore / v7x 2-TC)."""
    tile = _round_down(min(target, max(budget // max(bytes_per_item, 1), align)), align)
    tile = max(tile, align)
    tile = min(tile, m_padded)
    if m_padded >= min_grid * align:
        tile = min(tile, max(align, _round_down(m_padded // min_grid, align)))
    return int(tile)


# ----------------------------------------------------------------------------
# Kernels
# ----------------------------------------------------------------------------

def _augru_kernel_lane_major(x_ref, h_ref, att_ref, wih_ref, whh_ref,
                             b_rzn_ref, b_hn_ref, out_ref, *,
                             hidden_size: int, hidden_rows: int):
    """Lane-major ("transposed") AUGRU tile; rows live on the 128-lane axis.

    x_ref:     (I, TM)       inputs^T               (streamed, io dtype)
    h_ref:     (H, TM)       previous hidden^T      (streamed, io dtype)
    att_ref:   (1, TM)       attention score row    (streamed, f32, lane dense)
    wih_ref:   (3*Hr, I)     weight_ih (gates sublane-padded to Hr)  (resident)
    whh_ref:   (3*Hr, H)     weight_hh                                (resident)
    b_rzn_ref: (3*Hr, 1)     [b_ih_r+b_hh_r | b_ih_z+b_hh_z | b_ih_n] (resident)
    b_hn_ref:  (Hr, 1)       b_hh_n (stays inside reset_gate*(h_n+b)) (resident)
    out_ref:   (H, TM)       new hidden^T           (unmasked, lane-dense store)
    """
    H, Hr = hidden_size, hidden_rows

    x = x_ref[...]
    h = h_ref[...]
    att = att_ref[...]                               # (1, TM) f32

    # Two MXU matmuls with f32 accumulation; fused biases ride the x path.
    gi = jnp.dot(wih_ref[...], x, preferred_element_type=jnp.float32) + b_rzn_ref[...]
    gh = jnp.dot(whh_ref[...], h, preferred_element_type=jnp.float32)

    # Gate slices are sublane slices (Hr is a multiple of 8) -> cheap views.
    i_r, i_z, i_n = gi[0:Hr, :], gi[Hr:2 * Hr, :], gi[2 * Hr:3 * Hr, :]
    h_r, h_z, h_n = gh[0:Hr, :], gh[Hr:2 * Hr, :], gh[2 * Hr:3 * Hr, :]

    reset_gate = jax.nn.sigmoid(i_r + h_r)
    update_gate = jax.nn.sigmoid(i_z + h_z)
    new_state = jnp.tanh(i_n + reset_gate * (h_n + b_hn_ref[...]))

    # Attentional update gate: (1, TM) broadcasts over sublanes.
    u = att * update_gate
    if Hr != H:
        u = u[:H, :]
        new_state = new_state[:H, :]

    hf = h.astype(jnp.float32)
    hy = (1.0 - u) * hf + u * new_state
    out_ref[...] = hy.astype(out_ref.dtype)


def _augru_kernel_row_major(x_ref, h_ref, att_ref, wih_ref, whh_ref,
                            b_rzn_ref, b_hn_ref, out_ref, *,
                            hidden_size: int, hidden_pad: int):
    """Row-major AUGRU tile (used when H >= 128, already lane-dense).

    x_ref:     (TM, I)     h_ref: (TM, H)     att_ref: (TM, 1) f32
    wih_ref:   (I, 3*Hp)   whh_ref: (H, 3*Hp) (gates lane-padded to Hp)
    b_rzn_ref: (1, 3*Hp)   b_hn_ref: (1, Hp)  out_ref: (TM, H)
    """
    H, Hp = hidden_size, hidden_pad

    x = x_ref[...]
    h = h_ref[...]
    att = att_ref[...]                               # (TM, 1) f32

    gi = jnp.dot(x, wih_ref[...], preferred_element_type=jnp.float32) + b_rzn_ref[...]
    gh = jnp.dot(h, whh_ref[...], preferred_element_type=jnp.float32)

    i_r, i_z, i_n = gi[:, 0:Hp], gi[:, Hp:2 * Hp], gi[:, 2 * Hp:3 * Hp]
    h_r, h_z, h_n = gh[:, 0:Hp], gh[:, Hp:2 * Hp], gh[:, 2 * Hp:3 * Hp]

    reset_gate = jax.nn.sigmoid(i_r + h_r)
    update_gate = jax.nn.sigmoid(i_z + h_z)
    new_state = jnp.tanh(i_n + reset_gate * (h_n + b_hn_ref[...]))

    u = (att * update_gate)[:, :H]
    n = new_state[:, :H]
    hf = h.astype(jnp.float32)
    hy = (1.0 - u) * hf + u * n
    out_ref[...] = hy.astype(out_ref.dtype)


# ----------------------------------------------------------------------------
# Parameter packing (do this ONCE per set of weights, reuse across calls)
# ----------------------------------------------------------------------------

def pack_augru_params(w_ih, w_hh, b_ih=None, b_hh=None, *, io_dtype=None):
    """Packs AUGRUCell parameters for the Pallas kernel.

    w_ih: (3H, I), w_hh: (3H, H), b_ih/b_hh: (3H,) or None.
    io_dtype: dtype used for the streamed x/h and the resident weights
              (e.g. jnp.bfloat16 to halve HBM traffic). Biases stay f32.
    """
    H = w_hh.shape[1]
    I = w_ih.shape[1]
    assert w_ih.shape == (3 * H, I) and w_hh.shape == (3 * H, H)
    io_dtype = jnp.dtype(io_dtype) if io_dtype is not None else jnp.dtype(w_ih.dtype)

    if b_ih is None:
        b_ih = jnp.zeros((3 * H,), jnp.float32)
    if b_hh is None:
        b_hh = jnp.zeros((3 * H,), jnp.float32)
    b_ih = b_ih.astype(jnp.float32)
    b_hh = b_hh.astype(jnp.float32)

    # r/z biases can be pre-summed; b_ih_n rides the x path; b_hh_n must stay
    # separate (it sits inside reset_gate * (h_n + b_hh_n)).
    b_r = b_ih[:H] + b_hh[:H]
    b_z = b_ih[H:2 * H] + b_hh[H:2 * H]
    b_n_i = b_ih[2 * H:]
    b_n_h = b_hh[2 * H:]

    lane_major = H < 128

    if lane_major:
        Hr = _round_up(H, 8)                       # sublane-aligned gate stride

        def pad_gate_rows(w):
            if Hr == H:
                return w.astype(io_dtype)
            out = jnp.zeros((3 * Hr, w.shape[1]), io_dtype)
            for g in range(3):
                out = out.at[g * Hr:g * Hr + H].set(w[g * H:(g + 1) * H].astype(io_dtype))
            return out

        b_rzn = jnp.zeros((3 * Hr, 1), jnp.float32)
        for g, v in enumerate((b_r, b_z, b_n_i)):
            b_rzn = b_rzn.at[g * Hr:g * Hr + H, 0].set(v)
        b_hn = jnp.zeros((Hr, 1), jnp.float32).at[:H, 0].set(b_n_h)

        return dict(lane_major=True, H=H, I=I, Hr=Hr, io_dtype=io_dtype,
                    w_ih=pad_gate_rows(w_ih), w_hh=pad_gate_rows(w_hh),
                    b_rzn=b_rzn, b_hn=b_hn)
    else:
        Hp = _round_up(H, 128)                     # lane-aligned gate stride

        def pack_gate_cols(w):
            wt = w.T.astype(io_dtype)              # (in_dim, 3H)
            if Hp == H:
                return wt
            out = jnp.zeros((w.shape[1], 3 * Hp), io_dtype)
            for g in range(3):
                out = out.at[:, g * Hp:g * Hp + H].set(wt[:, g * H:(g + 1) * H])
            return out

        b_rzn = jnp.zeros((1, 3 * Hp), jnp.float32)
        for g, v in enumerate((b_r, b_z, b_n_i)):
            b_rzn = b_rzn.at[0, g * Hp:g * Hp + H].set(v)
        b_hn = jnp.zeros((1, Hp), jnp.float32).at[0, :H].set(b_n_h)

        return dict(lane_major=False, H=H, I=I, Hp=Hp, io_dtype=io_dtype,
                    w_ih=pack_gate_cols(w_ih), w_hh=pack_gate_cols(w_hh),
                    b_rzn=b_rzn, b_hn=b_hn)


# ----------------------------------------------------------------------------
# Wrappers (layout plumbing only; all compute lives in the kernels)
# ----------------------------------------------------------------------------

def _call_lane_major(x2, h2, a2, p, out_dtype, *, target, vmem_limit, min_grid):
    M, I = x2.shape
    H, Hr = p["H"], p["Hr"]
    io_dtype = p["io_dtype"]
    io_sz = jnp.dtype(io_dtype).itemsize

    # Rows on the lane axis; pad at most 127 extra columns (fuses with the
    # transpose copy).  Ragged final grid blocks are masked by the pipeline.
    Mp = _round_up(M, 128)
    xT = x2.T.astype(io_dtype)                     # (I, M)
    hT = h2.T.astype(io_dtype)                     # (H, M)
    aT = a2.T.astype(jnp.float32)                  # (1, M), lane-dense att
    if Mp != M:
        padc = ((0, 0), (0, Mp - M))
        xT, hT, aT = (jnp.pad(v, padc) for v in (xT, hT, aT))

    # VMEM budget: resident packed weights (double-buffered) + per-column
    # streamed bytes + f32 matmul/activation temporaries (estimate).
    resident = 2 * (3 * Hr * (I + H) * io_sz + (3 * Hr + Hr) * 4)
    bytes_per_col = 2 * (I + 2 * H) * io_sz + 2 * 8 * 4 + 56 * Hr
    budget = max((vmem_limit * 3) // 4 - resident, 128 * bytes_per_col)
    TM = _choose_tile(Mp, bytes_per_col, target=target, align=128,
                      budget=budget, min_grid=min_grid)
    grid = int(pl.cdiv(Mp, TM))

    kernel = functools.partial(_augru_kernel_lane_major,
                               hidden_size=H, hidden_rows=Hr)
    outT = pl.pallas_call(
        kernel,
        out_shape=jax.ShapeDtypeStruct((H, Mp), out_dtype),
        grid=(grid,),
        in_specs=[
            pl.BlockSpec((I, TM), lambda i: (0, i)),        # x^T   (streamed)
            pl.BlockSpec((H, TM), lambda i: (0, i)),        # h^T   (streamed)
            pl.BlockSpec((1, TM), lambda i: (0, i)),        # att   (streamed, dense)
            pl.BlockSpec((3 * Hr, I), lambda i: (0, 0)),    # W_ih  (resident)
            pl.BlockSpec((3 * Hr, H), lambda i: (0, 0)),    # W_hh  (resident)
            pl.BlockSpec((3 * Hr, 1), lambda i: (0, 0)),    # fused bias (resident)
            pl.BlockSpec((Hr, 1), lambda i: (0, 0)),        # b_hh_n (resident)
        ],
        out_specs=pl.BlockSpec((H, TM), lambda i: (0, i)),
        compiler_params=pltpu.CompilerParams(
            dimension_semantics=("parallel",),
            vmem_limit_bytes=vmem_limit,
        ),
    )(xT, hT, aT, p["w_ih"], p["w_hh"], p["b_rzn"], p["b_hn"])

    return outT[:, :M].T                            # (M, H)


def _call_row_major(x2, h2, a2, p, out_dtype, *, target, vmem_limit, min_grid):
    M, I = x2.shape
    H, Hp = p["H"], p["Hp"]
    io_dtype = p["io_dtype"]
    io_sz = jnp.dtype(io_dtype).itemsize

    Mp = _round_up(M, 16)                           # bf16-safe sublane multiple
    x2p = x2.astype(io_dtype)
    h2p = h2.astype(io_dtype)
    a2p = a2.astype(jnp.float32)
    if Mp != M:
        padr = ((0, Mp - M), (0, 0))
        x2p, h2p, a2p = (jnp.pad(v, padr) for v in (x2p, h2p, a2p))

    resident = 2 * ((I + H) * 3 * Hp * io_sz + (3 * Hp + Hp) * 4)
    bytes_per_row = 2 * (I + 2 * H) * io_sz + 2 * 128 * 4 + 56 * Hp
    budget = max((vmem_limit * 3) // 4 - resident, 16 * bytes_per_row)
    TM = _choose_tile(Mp, bytes_per_row, target=target, align=16,
                      budget=budget, min_grid=min_grid)
    grid = int(pl.cdiv(Mp, TM))

    kernel = functools.partial(_augru_kernel_row_major,
                               hidden_size=H, hidden_pad=Hp)
    out = pl.pallas_call(
        kernel,
        out_shape=jax.ShapeDtypeStruct((Mp, H), out_dtype),
        grid=(grid,),
        in_specs=[
            pl.BlockSpec((TM, I), lambda i: (i, 0)),        # x    (streamed)
            pl.BlockSpec((TM, H), lambda i: (i, 0)),        # h    (streamed)
            pl.BlockSpec((TM, 1), lambda i: (i, 0)),        # att  (streamed)
            pl.BlockSpec((I, 3 * Hp), lambda i: (0, 0)),    # W_ih (resident)
            pl.BlockSpec((H, 3 * Hp), lambda i: (0, 0)),    # W_hh (resident)
            pl.BlockSpec((1, 3 * Hp), lambda i: (0, 0)),    # fused bias (resident)
            pl.BlockSpec((1, Hp), lambda i: (0, 0)),        # b_hh_n (resident)
        ],
        out_specs=pl.BlockSpec((TM, H), lambda i: (i, 0)),
        compiler_params=pltpu.CompilerParams(
            dimension_semantics=("parallel",),
            vmem_limit_bytes=vmem_limit,
        ),
    )(x2p, h2p, a2p, p["w_ih"], p["w_hh"], p["b_rzn"], p["b_hn"])

    return out[:M]                                   # (M, H)


def augru_cell_packed(inputs, hx, att_score, params, *, block_size: int = 4096,
                      out_dtype=None, vmem_limit_bytes=None, min_grid_steps: int = 4):
    """AUGRU forward with pre-packed parameters (see pack_augru_params)."""
    B, T, I = inputs.shape
    H = params["H"]
    assert I == params["I"] and hx.shape == (B, T, H)
    M = B * T
    out_dtype = jnp.dtype(out_dtype) if out_dtype is not None else inputs.dtype
    vmem_limit = _pick_vmem_limit(vmem_limit_bytes)

    x2 = inputs.reshape(M, I)
    h2 = hx.reshape(M, H)
    a2 = att_score.reshape(M, 1)

    if params["lane_major"]:
        out2 = _call_lane_major(x2, h2, a2, params, out_dtype,
                                target=block_size, vmem_limit=vmem_limit,
                                min_grid=min_grid_steps)
    else:
        out2 = _call_row_major(x2, h2, a2, params, out_dtype,
                               target=block_size, vmem_limit=vmem_limit,
                               min_grid=min_grid_steps)
    return out2.reshape(B, T, H)


def augru_cell(inputs, hx, att_score, w_ih, w_hh, b_ih=None, b_hh=None, *,
               io_dtype=None, **kwargs):
    """Convenience wrapper: packs parameters then calls the Pallas kernel."""
    params = pack_augru_params(w_ih, w_hh, b_ih, b_hh, io_dtype=io_dtype)
    return augru_cell_packed(inputs, hx, att_score, params, **kwargs)


# ----------------------------------------------------------------------------
# Plain-JAX reference mirroring the PyTorch forward exactly
# ----------------------------------------------------------------------------

def augru_reference(inputs, hx, att_score, w_ih, w_hh, b_ih, b_hh):
    H = hx.shape[-1]
    gi = jnp.einsum('bti,oi->bto', inputs, w_ih) + b_ih
    gh = jnp.einsum('bth,oh->bto', hx, w_hh) + b_hh
    i_r, i_z, i_n = gi[..., :H], gi[..., H:2 * H], gi[..., 2 * H:]
    h_r, h_z, h_n = gh[..., :H], gh[..., H:2 * H], gh[..., 2 * H:]
    reset_gate = jax.nn.sigmoid(i_r + h_r)
    update_gate = jax.nn.sigmoid(i_z + h_z)
    new_state = jnp.tanh(i_n + reset_gate * h_n)
    update_gate = att_score * update_gate
    return (1.0 - update_gate) * hx + update_gate * new_state


if __name__ == "__main__":
    # Small shapes consistent with the module: batch=2, seq=8, input=32, hidden=32.
    B, T, I, H = 2, 8, 32, 32

    key = jax.random.PRNGKey(0)
    k1, k2, k3, k4, k5 = jax.random.split(key, 5)

    inputs = jax.random.normal(k1, (B, T, I), dtype=jnp.float32)
    hx = jax.random.normal(k2, (B, T, H), dtype=jnp.float32)
    att_score = jax.nn.sigmoid(jax.random.normal(k3, (B, T, 1), dtype=jnp.float32))

    # Module __init__ leaves weights uninitialized, biases zeroed — use small
    # deterministic random weights and zero biases.
    w_ih = jax.random.normal(k4, (3 * H, I), dtype=jnp.float32) * 0.1
    w_hh = jax.random.normal(k5, (3 * H, H), dtype=jnp.float32) * 0.1
    b_ih = jnp.zeros((3 * H,), dtype=jnp.float32)
    b_hh = jnp.zeros((3 * H,), dtype=jnp.float32)

    hy_ref = augru_reference(inputs, hx, att_score, w_ih, w_hh, b_ih, b_hh)

    # 1) f32 I/O, lane-major (H < 128) path — pack weights once, reuse below.
    params_f32 = pack_augru_params(w_ih, w_hh, b_ih, b_hh, io_dtype=jnp.float32)
    hy = jax.block_until_ready(augru_cell_packed(inputs, hx, att_score, params_f32))
    np.testing.assert_allclose(np.asarray(hy), np.asarray(hy_ref),
                               rtol=1e-4, atol=1e-4)

    # 2) bf16 I/O (halves HBM traffic), f32 MXU accumulation + f32 activations.
    params_bf16 = pack_augru_params(w_ih, w_hh, b_ih, b_hh, io_dtype=jnp.bfloat16)
    hy_bf = jax.block_until_ready(augru_cell_packed(inputs, hx, att_score, params_bf16))
    np.testing.assert_allclose(np.asarray(hy_bf), np.asarray(hy_ref),
                               rtol=5e-2, atol=5e-2)

    # 3) Multi-step pipelined grid (M = 384 rows, forced 128-column tiles).
    B2, T2 = 4, 96
    inputs2 = jax.random.normal(k1, (B2, T2, I), dtype=jnp.float32)
    hx2 = jax.random.normal(k2, (B2, T2, H), dtype=jnp.float32)
    att2 = jax.nn.sigmoid(jax.random.normal(k3, (B2, T2, 1), dtype=jnp.float32))
    ref2 = augru_reference(inputs2, hx2, att2, w_ih, w_hh, b_ih, b_hh)
    hy2 = jax.block_until_ready(
        augru_cell_packed(inputs2, hx2, att2, params_f32, block_size=128))
    np.testing.assert_allclose(np.asarray(hy2), np.asarray(ref2),
                               rtol=1e-4, atol=1e-4)

    # 4) H >= 128 exercises the row-major (already lane-dense) path.
    H2 = 128
    w_ih2 = jax.random.normal(k4, (3 * H2, I), dtype=jnp.float32) * 0.1
    w_hh2 = jax.random.normal(k5, (3 * H2, H2), dtype=jnp.float32) * 0.05
    b2 = jnp.zeros((3 * H2,), dtype=jnp.float32)
    hx3 = jax.random.normal(k2, (B, T, H2), dtype=jnp.float32)
    ref3 = augru_reference(inputs, hx3, att_score, w_ih2, w_hh2, b2, b2)
    hy3 = jax.block_until_ready(
        augru_cell(inputs, hx3, att_score, w_ih2, w_hh2, b2, b2))
    np.testing.assert_allclose(np.asarray(hy3), np.asarray(ref3),
                               rtol=1e-4, atol=1e-4)

    print("KERNEL_OK")
</pallas_src>

<mosaic_0001>
module attributes {stable_mosaic.version = 11 : i64} {
  func.func @_augru_kernel_lane_major(%arg0: i32, %arg1: memref<32x128xf32, #tpu.memory_space<vmem>>, %arg2: memref<32x128xf32, #tpu.memory_space<vmem>>, %arg3: memref<1x128xf32, #tpu.memory_space<vmem>>, %arg4: memref<96x32xf32, #tpu.memory_space<vmem>>, %arg5: memref<96x32xf32, #tpu.memory_space<vmem>>, %arg6: memref<96x1xf32, #tpu.memory_space<vmem>>, %arg7: memref<32x1xf32, #tpu.memory_space<vmem>>, %arg8: memref<32x128xf32, #tpu.memory_space<vmem>>) attributes {dimension_semantics = [#tpu.dimension_semantics<parallel>], iteration_bounds = array<i64: 1>, scalar_prefetch = 0 : i64, scratch_operands = 0 : i64, tpu.core_type = #tpu.core_type<tc>, window_params = [{transform_indices = @transform_0, window_bounds = array<i64: 32, 128>}, {transform_indices = @transform_1, window_bounds = array<i64: 32, 128>}, {transform_indices = @transform_2, window_bounds = array<i64: 1, 128>}, {pipeline_mode = #tpu.pipeline_mode<synchronous>, transform_indices = @transform_3, window_bounds = array<i64: 96, 32>}, {pipeline_mode = #tpu.pipeline_mode<synchronous>, transform_indices = @transform_4, window_bounds = array<i64: 96, 32>}, {pipeline_mode = #tpu.pipeline_mode<synchronous>, transform_indices = @transform_5, window_bounds = array<i64: 96, 1>}, {pipeline_mode = #tpu.pipeline_mode<synchronous>, transform_indices = @transform_6, window_bounds = array<i64: 32, 1>}, {transform_indices = @transform_7, window_bounds = array<i64: 32, 128>}]} {
    %c0 = arith.constant 0 : index
    %c0_0 = arith.constant 0 : index
    %0 = vector.load %arg1[%c0, %c0_0] : memref<32x128xf32, #tpu.memory_space<vmem>>, vector<32x128xf32>
    %c0_1 = arith.constant 0 : index
    %c0_2 = arith.constant 0 : index
    %1 = vector.load %arg2[%c0_1, %c0_2] : memref<32x128xf32, #tpu.memory_space<vmem>>, vector<32x128xf32>
    %c0_3 = arith.constant 0 : index
    %c0_4 = arith.constant 0 : index
    %2 = vector.load %arg3[%c0_3, %c0_4] : memref<1x128xf32, #tpu.memory_space<vmem>>, vector<1x128xf32>
    %c0_5 = arith.constant 0 : index
    %c0_6 = arith.constant 0 : index
    %3 = vector.load %arg4[%c0_5, %c0_6] : memref<96x32xf32, #tpu.memory_space<vmem>>, vector<96x32xf32>
    %cst = arith.constant dense<0.000000e+00> : vector<96x128xf32>
    %4 = tpu.matmul %3, %0, %cst {dimension_numbers = #tpu.dot_dimension_numbers<[1], [0], [0], [1], [0, 0, 1, 1], [], []>} : vector<96x32xf32>, vector<32x128xf32>, vector<96x128xf32> -> vector<96x128xf32>
    %c0_7 = arith.constant 0 : index
    %c0_8 = arith.constant 0 : index
    %5 = vector.load %arg6[%c0_7, %c0_8] : memref<96x1xf32, #tpu.memory_space<vmem>>, vector<96x1xf32>
    %6 = vector.broadcast %5 : vector<96x1xf32> to vector<96x128xf32>
    %7 = arith.addf %4, %6 : vector<96x128xf32>
    %c0_9 = arith.constant 0 : index
    %c0_10 = arith.constant 0 : index
    %8 = vector.load %arg5[%c0_9, %c0_10] : memref<96x32xf32, #tpu.memory_space<vmem>>, vector<96x32xf32>
    %cst_11 = arith.constant dense<0.000000e+00> : vector<96x128xf32>
    %9 = tpu.matmul %8, %1, %cst_11 {dimension_numbers = #tpu.dot_dimension_numbers<[1], [0], [0], [1], [0, 0, 1, 1], [], []>} : vector<96x32xf32>, vector<32x128xf32>, vector<96x128xf32> -> vector<96x128xf32>
    %10 = vector.extract_strided_slice %7 {offsets = [0, 0], sizes = [32, 128], strides = [1, 1]} : vector<96x128xf32> to vector<32x128xf32>
    %11 = vector.extract_strided_slice %7 {offsets = [32, 0], sizes = [32, 128], strides = [1, 1]} : vector<96x128xf32> to vector<32x128xf32>
    %12 = vector.extract_strided_slice %7 {offsets = [64, 0], sizes = [32, 128], strides = [1, 1]} : vector<96x128xf32> to vector<32x128xf32>
    %13 = vector.extract_strided_slice %9 {offsets = [0, 0], sizes = [32, 128], strides = [1, 1]} : vector<96x128xf32> to vector<32x128xf32>
    %14 = vector.extract_strided_slice %9 {offsets = [32, 0], sizes = [32, 128], strides = [1, 1]} : vector<96x128xf32> to vector<32x128xf32>
    %15 = vector.extract_strided_slice %9 {offsets = [64, 0], sizes = [32, 128], strides = [1, 1]} : vector<96x128xf32> to vector<32x128xf32>
    %16 = arith.addf %10, %13 : vector<32x128xf32>
    %17 = arith.negf %16 : vector<32x128xf32>
    %18 = math.exp %17 : vector<32x128xf32>
    %cst_12 = arith.constant 1.000000e+00 : f32
    %19 = vector.broadcast %cst_12 : f32 to vector<32x128xf32>
    %20 = arith.addf %19, %18 : vector<32x128xf32>
    %21 = arith.divf %19, %20 : vector<32x128xf32>
    %22 = arith.addf %11, %14 : vector<32x128xf32>
    %23 = arith.negf %22 : vector<32x128xf32>
    %24 = math.exp %23 : vector<32x128xf32>
    %cst_13 = arith.constant 1.000000e+00 : f32
    %25 = vector.broadcast %cst_13 : f32 to vector<32x128xf32>
    %26 = arith.addf %25, %24 : vector<32x128xf32>
    %27 = arith.divf %25, %26 : vector<32x128xf32>
    %c0_14 = arith.constant 0 : index
    %c0_15 = arith.constant 0 : index
    %28 = vector.load %arg7[%c0_14, %c0_15] : memref<32x1xf32, #tpu.memory_space<vmem>>, vector<32x1xf32>
    %29 = vector.broadcast %28 : vector<32x1xf32> to vector<32x128xf32>
    %30 = arith.addf %15, %29 : vector<32x128xf32>
    %31 = arith.mulf %21, %30 : vector<32x128xf32>
    %32 = arith.addf %12, %31 : vector<32x128xf32>
    %33 = math.tanh %32 : vector<32x128xf32>
    %34 = vector.broadcast %2 : vector<1x128xf32> to vector<32x128xf32>
    %35 = arith.mulf %34, %27 : vector<32x128xf32>
    %cst_16 = arith.constant 1.000000e+00 : f32
    %36 = vector.broadcast %cst_16 : f32 to vector<32x128xf32>
    %37 = arith.subf %36, %35 : vector<32x128xf32>
    %38 = arith.mulf %37, %1 : vector<32x128xf32>
    %39 = arith.mulf %35, %33 : vector<32x128xf32>
    %40 = arith.addf %38, %39 : vector<32x128xf32>
    %c0_17 = arith.constant 0 : index
    %c0_18 = arith.constant 0 : index
    %41 = vector.load %arg8[%c0_17, %c0_18] : memref<32x128xf32, #tpu.memory_space<vmem>>, vector<32x128xf32>
    tpu.vector_store %arg8[%c0_17, %c0_18], %40 {strides = array<i32>} : memref<32x128xf32, #tpu.memory_space<vmem>>, vector<32x128xf32>,
    return
  }
  func.func @transform_0(%arg0: i32) -> (i32, i32) {
    %c0_i32 = arith.constant 0 : i32
    %c0_i32_0 = arith.constant 0 : i32
    return %c0_i32, %arg0 : i32, i32
  }
  func.func @transform_1(%arg0: i32) -> (i32, i32) {
    %c0_i32 = arith.constant 0 : i32
    %c0_i32_0 = arith.constant 0 : i32
    return %c0_i32, %arg0 : i32, i32
  }
  func.func @transform_2(%arg0: i32) -> (i32, i32) {
    %c0_i32 = arith.constant 0 : i32
    %c0_i32_0 = arith.constant 0 : i32
    return %c0_i32, %arg0 : i32, i32
  }
  func.func @transform_3(%arg0: i32) -> (i32, i32) {
    %c0_i32 = arith.constant 0 : i32
    %c0_i32_0 = arith.constant 0 : i32
    %c0_i32_1 = arith.constant 0 : i32
    return %c0_i32, %c0_i32_0 : i32, i32
  }
  func.func @transform_4(%arg0: i32) -> (i32, i32) {
    %c0_i32 = arith.constant 0 : i32
    %c0_i32_0 = arith.constant 0 : i32
    %c0_i32_1 = arith.constant 0 : i32
    return %c0_i32, %c0_i32_0 : i32, i32
  }
  func.func @transform_5(%arg0: i32) -> (i32, i32) {
    %c0_i32 = arith.constant 0 : i32
    %c0_i32_0 = arith.constant 0 : i32
    %c0_i32_1 = arith.constant 0 : i32
    return %c0_i32, %c0_i32_0 : i32, i32
  }
  func.func @transform_6(%arg0: i32) -> (i32, i32) {
    %c0_i32 = arith.constant 0 : i32
    %c0_i32_0 = arith.constant 0 : i32
    %c0_i32_1 = arith.constant 0 : i32
    return %c0_i32, %c0_i32_0 : i32, i32
  }
  func.func @transform_7(%arg0: i32) -> (i32, i32) {
    %c0_i32 = arith.constant 0 : i32
    %c0_i32_0 = arith.constant 0 : i32
    return %c0_i32, %arg0 : i32, i32
  }
}

</mosaic_0001>

<llo_original>
// kernel: tpu_custom_call.1
$region0: #{tpu_custom_call.1}
  #allocation0 [shape = 'u32[]', space=smem, size = 0x4, offset = 0x4, fixed_abs, tag = 'smem constant byte address 0x4 - core index']
  #allocation1 [shape = 'u32[144,128]{1,0:T(1,128)}', space=vmem, size = 0x12000, scoped, tag = 'internal scratch']
  %s0 = inlined_call_operand.vmem [shape: f32[32,128], index: 0, kind: input, shape index: {}]
  %s1 = inlined_call_operand.vmem [shape: f32[32,128], index: 1, kind: input, shape index: {}]
  %s2 = inlined_call_operand.vmem [shape: f32[1,128], index: 2, kind: input, shape index: {}]
  %s3 = inlined_call_operand.vmem [shape: f32[96,32], index: 3, kind: input, shape index: {}]
  %s4 = inlined_call_operand.vmem [shape: f32[96,32], index: 4, kind: input, shape index: {}]
  %s5 = inlined_call_operand.vmem [shape: f32[96,1], index: 5, kind: input, shape index: {}]
  %s6 = inlined_call_operand.vmem [shape: f32[32,1], index: 6, kind: input, shape index: {}]
  %s7 = inlined_call_operand.hbm [shape: f32[32,128], index: 7, kind: output, shape index: {}]
  %s8 = sld [smem:[#allocation0]]
  $region38: #{tpu_custom_call.1} parent=0
    _
  %s10 = ssub.s32 1, %s8
  %s11 = scalar_select 0, %s10, %s8
  $region1: #{tpu_custom_call.1} parent=0
    #allocation2 [shape = 'u8[16384]{0}', space=vmem, size = 0x4000, scoped, tag = 'output window, operand 0, single buffered']
    #allocation3 [shape = 's32[1]{0}', space=sflag, size = 0x4, scoped, tag = 'scoped memory for tpu_custom_call.1']
    %12 = vsyncpa [#allocation3], 0
    // Predicated region
    $region2: #{tpu_custom_call.1} parent=1 // pred_check
      _
    $region3: #{tpu_custom_call.1} parent=1 // pred_check_branch
      %14 = sbr.rel (0) target = $region5
    $region4: #{tpu_custom_call.1} parent=1 // pred_region
      _
    $region5: #{tpu_custom_call.1} parent=1 // pred_fallthru
      _
    // Predicated region
    $region6: #{tpu_custom_call.1} parent=1 // pred_check
      _
    $region7: #{tpu_custom_call.1} parent=1 // pred_check_branch
      %16 = sbr.rel (0) target = $region9
    $region8: #{tpu_custom_call.1} parent=1 // pred_region
      _
    $region9: #{tpu_custom_call.1} parent=1 // pred_fallthru
      _
    // Predicated region
    $region10: #{tpu_custom_call.1} parent=1 // pred_check
      _
    $region11: #{tpu_custom_call.1} parent=1 // pred_check_branch
      %18 = sbr.rel (0) target = $region13
    $region12: #{tpu_custom_call.1} parent=1 // pred_region
      _
    $region13: #{tpu_custom_call.1} parent=1 // pred_fallthru
      _
    // Predicated region
    $region14: #{tpu_custom_call.1} parent=1 // pred_check
      _
    $region15: #{tpu_custom_call.1} parent=1 // pred_check_branch
      %20 = sbr.rel (0) target = $region17
    $region16: #{tpu_custom_call.1} parent=1 // pred_region
      _
    $region17: #{tpu_custom_call.1} parent=1 // pred_fallthru
      _
    // Predicated region
    $region18: #{tpu_custom_call.1} parent=1 // pred_check
      _
    $region19: #{tpu_custom_call.1} parent=1 // pred_check_branch
      %22 = sbr.rel (0) target = $region21
    $region20: #{tpu_custom_call.1} parent=1 // pred_region
      _
    $region21: #{tpu_custom_call.1} parent=1 // pred_fallthru
      _
    // Predicated region
    $region22: #{tpu_custom_call.1} parent=1 // pred_check
      _
    $region23: #{tpu_custom_call.1} parent=1 // pred_check_branch
      %24 = sbr.rel (0) target = $region25
    $region24: #{tpu_custom_call.1} parent=1 // pred_region
      _
    $region25: #{tpu_custom_call.1} parent=1 // pred_fallthru
      _
    // Predicated region
    $region26: #{tpu_custom_call.1} parent=1 // pred_check
      _
    $region27: #{tpu_custom_call.1} parent=1 // pred_check_branch
      %26 = sbr.rel (0) target = $region29
    $region28: #{tpu_custom_call.1} parent=1 // pred_region
      _
    $region29: #{tpu_custom_call.1} parent=1 // pred_fallthru
      _
    %v27 = vld [vmem:[%s0] sm:$0xff]
    %v28 = vld [vmem:[%s0 + $0x8] sm:$0xff]
    %v29 = vld [vmem:[%s0 + $0x10] sm:$0xff]
    %v30 = vld [vmem:[%s0 + $0x18] sm:$0xff]
    %v31 = vld [vmem:[%s1] sm:$0xff]
    %v32 = vld [vmem:[%s1 + $0x8] sm:$0xff]
    %v33 = vld [vmem:[%s1 + $0x10] sm:$0xff]
    %v34 = vld [vmem:[%s1 + $0x18] sm:$0xff]
    %v35 = vld [vmem:[%s2] sm:$0x1]
    %v36 = vld [vmem:[%s3] sm:$0xff]
    %v37 = vld [vmem:[%s3 + $0x8] sm:$0xff]
    %v38 = vld [vmem:[%s3 + $0x10] sm:$0xff]
    %v39 = vld [vmem:[%s3 + $0x18] sm:$0xff]
    %v40 = vld [vmem:[%s3 + $0x20] sm:$0xff]
    %v41 = vld [vmem:[%s3 + $0x28] sm:$0xff]
    %v42 = vld [vmem:[%s3 + $0x30] sm:$0xff]
    %v43 = vld [vmem:[%s3 + $0x38] sm:$0xff]
    %v44 = vld [vmem:[%s3 + $0x40] sm:$0xff]
    %v45 = vld [vmem:[%s3 + $0x48] sm:$0xff]
    %v46 = vld [vmem:[%s3 + $0x50] sm:$0xff]
    %v47 = vld [vmem:[%s3 + $0x58] sm:$0xff]
    %v48 = vld [vmem:[%s5] sm:$0xff]
    %v49 = vld [vmem:[%s5 + $0x8] sm:$0xff]
    %v50 = vld [vmem:[%s5 + $0x10] sm:$0xff]
    %v51 = vld [vmem:[%s5 + $0x18] sm:$0xff]
    %v52 = vld [vmem:[%s5 + $0x20] sm:$0xff]
    %v53 = vld [vmem:[%s5 + $0x28] sm:$0xff]
    %v54 = vld [vmem:[%s5 + $0x30] sm:$0xff]
    %v55 = vld [vmem:[%s5 + $0x38] sm:$0xff]
    %v56 = vld [vmem:[%s5 + $0x40] sm:$0xff]
    %v57 = vld [vmem:[%s5 + $0x48] sm:$0xff]
    %v58 = vld [vmem:[%s5 + $0x50] sm:$0xff]
    %v59 = vld [vmem:[%s5 + $0x58] sm:$0xff]
    %61 = vset.pattern.permute.xlu0 0
    %62 = vperm.xlu0 %61, %v48
    %v63 = vpop.permute.xlu0 %62
    %66 = vset.pattern.permute.xlu0 0
    %67 = vperm.xlu0 %66, %v49
    %v68 = vpop.permute.xlu0 %67
    %71 = vset.pattern.permute.xlu0 0
    %72 = vperm.xlu0 %71, %v50
    %v73 = vpop.permute.xlu0 %72
    %76 = vset.pattern.permute.xlu0 0
    %77 = vperm.xlu0 %76, %v51
    %v78 = vpop.permute.xlu0 %77
    %81 = vset.pattern.permute.xlu0 0
    %82 = vperm.xlu0 %81, %v52
    %v83 = vpop.permute.xlu0 %82
    %86 = vset.pattern.permute.xlu0 0
    %87 = vperm.xlu0 %86, %v53
    %v88 = vpop.permute.xlu0 %87
    %91 = vset.pattern.permute.xlu0 0
    %92 = vperm.xlu0 %91, %v54
    %v93 = vpop.permute.xlu0 %92
    %96 = vset.pattern.permute.xlu0 0
    %97 = vperm.xlu0 %96, %v55
    %v98 = vpop.permute.xlu0 %97
    %101 = vset.pattern.permute.xlu0 0
    %102 = vperm.xlu0 %101, %v56
    %v103 = vpop.permute.xlu0 %102
    %106 = vset.pattern.permute.xlu0 0
    %107 = vperm.xlu0 %106, %v57
    %v108 = vpop.permute.xlu0 %107
    %111 = vset.pattern.permute.xlu0 0
    %112 = vperm.xlu0 %111, %v58
    %v113 = vpop.permute.xlu0 %112
    %116 = vset.pattern.permute.xlu0 0
    %117 = vperm.xlu0 %116, %v59
    %v118 = vpop.permute.xlu0 %117
    %vm120 = vcmask 261120
    %v122 = vsel %vm120, %v36, 0
    %v125 = vsel %vm120, %v37, 0
    %v128 = vsel %vm120, %v38, 0
    %v131 = vsel %vm120, %v39, 0
    %v134 = vsel %vm120, %v40, 0
    %v137 = vsel %vm120, %v41, 0
    %v140 = vsel %vm120, %v42, 0
    %v143 = vsel %vm120, %v43, 0
    %v146 = vsel %vm120, %v44, 0
    %v149 = vsel %vm120, %v45, 0
    %v152 = vsel %vm120, %v46, 0
    %v155 = vsel %vm120, %v47, 0
    %157 = vmatprep.subr.mxu0 0.0
    %158 = vmatpush1.msra.mxu0 0.0
    %159 = vmatprep.subr.mxu0 0.0
    %160 = vmatpush1.msra.mxu0 0.0
    %161 = vmatprep.subr.mxu0 0.0
    %162 = vmatpush1.msra.mxu0 0.0
    %163 = vmatprep.subr.mxu0 0.0
    %164 = vmatpush1.msra.mxu0 0.0
    %165 = vmatprep.subr.mxu0 0.0
    %166 = vmatpush1.msra.mxu0 0.0
    %167 = vmatprep.subr.mxu0 0.0
    %168 = vmatpush1.msra.mxu0 0.0
    %169 = vmatprep.subr.mxu0 0.0
    %170 = vmatpush1.msra.mxu0 0.0
    %171 = vmatprep.subr.mxu0 0.0
    %172 = vmatpush1.msra.mxu0 0.0
    %173 = vmatprep.subr.mxu0 0.0
    %174 = vmatpush1.msra.mxu0 0.0
    %175 = vmatprep.subr.mxu0 0.0
    %176 = vmatpush1.msra.mxu0 0.0
    %177 = vmatprep.subr.mxu0 0.0
    %178 = vmatpush1.msra.mxu0 0.0
    %179 = vmatprep.subr.mxu0 0.0
    %180 = vmatpush1.msra.mxu0 0.0
    %181 = vmatprep.subr.mxu0 0.0
    %182 = vmatpush1.msra.mxu0 %v30
    %183 = vmatprep.subr.mxu0 0.0
    %184 = vmatpush1.msra.mxu0 %v29
    %185 = vmatprep.subr.mxu0 0.0
    %186 = vmatpush1.msra.mxu0 %v28
    %187 = vmatprep.subr.mxu0 0.0
    %188 = vmatpush1.msra.mxu0 %v27
    %189 = vmatprep.subr.mxu0 0.0
    %190 = vmatpush2.msra.mxu0 0.0
    %191 = vmatprep.subr.mxu0 0.0
    %192 = vmatpush2.msra.mxu0 0.0
    %193 = vmatprep.subr.mxu0 0.0
    %194 = vmatpush2.msra.mxu0 0.0
    %195 = vmatprep.subr.mxu0 0.0
    %196 = vmatpush2.msra.mxu0 0.0
    %197 = vmatprep.subr.mxu0 0.0
    %198 = vmatpush2.msra.mxu0 0.0
    %199 = vmatprep.subr.mxu0 0.0
    %200 = vmatpush2.msra.mxu0 0.0
    %201 = vmatprep.subr.mxu0 0.0
    %202 = vmatpush2.msra.mxu0 0.0
    %203 = vmatprep.subr.mxu0 0.0
    %204 = vmatpush2.msra.mxu0 0.0
    %205 = vmatprep.subr.mxu0 0.0
    %206 = vmatpush2.msra.mxu0 0.0
    %207 = vmatprep.subr.mxu0 0.0
    %208 = vmatpush2.msra.mxu0 0.0
    %209 = vmatprep.subr.mxu0 0.0
    %210 = vmatpush2.msra.mxu0 0.0
    %211 = vmatprep.subr.mxu0 0.0
    %212 = vmatpush2.msra.mxu0 0.0
    %213 = vmatprep.subr.mxu0 0.0
    %214 = vmatpush2.msra.mxu0 0.0
    %215 = vmatprep.subr.mxu0 0.0
    %216 = vmatpush2.msra.mxu0 0.0
    %217 = vmatprep.subr.mxu0 0.0
    %218 = vmatpush2.msra.mxu0 0.0
    %219 = vmatprep.subr.mxu0 0.0
    %220 = vmatpush2.msra.mxu0 0.0
    %221 = vmatprep.mubr.f32.mxu0 0.0
    %222 = vmatmul.mubr.f32.gmra.mxu0 %v122
    %v223 = vpop.f32.mrf.mxu0
    %v224 = vadd.f32 %v63, %v223
    %v225 = vpop.f32.mrf.mxu0
    %226 = vmatprep.mubr.f32.mxu0 0.0
    %227 = vmatmul.mubr.f32.gmra.mxu0 %v125
    %v228 = vpop.f32.mrf.mxu0
    %v229 = vadd.f32 %v68, %v228
    %v230 = vpop.f32.mrf.mxu0
    %231 = vmatprep.mubr.f32.mxu0 0.0
    %232 = vmatmul.mubr.f32.gmra.mxu0 %v128
    %v233 = vpop.f32.mrf.mxu0
    %v234 = vadd.f32 %v73, %v233
    %v235 = vpop.f32.mrf.mxu0
    %236 = vmatprep.mubr.f32.mxu0 0.0
    %237 = vmatmul.mubr.f32.gmra.mxu0 %v131
    %v238 = vpop.f32.mrf.mxu0
    %v239 = vadd.f32 %v78, %v238
    %v240 = vpop.f32.mrf.mxu0
    %241 = vmatprep.mubr.f32.mxu0 0.0
    %242 = vmatmul.mubr.f32.gmra.mxu0 %v134
    %v243 = vpop.f32.mrf.mxu0
    %v244 = vadd.f32 %v83, %v243
    %v245 = vpop.f32.mrf.mxu0
    %246 = vmatprep.mubr.f32.mxu0 0.0
    %247 = vmatmul.mubr.f32.gmra.mxu0 %v137
    %v248 = vpop.f32.mrf.mxu0
    %v249 = vadd.f32 %v88, %v248
    %v250 = vpop.f32.mrf.mxu0
    %251 = vmatprep.mubr.f32.mxu0 0.0
    %252 = vmatmul.mubr.f32.gmra.mxu0 %v140
    %v253 = vpop.f32.mrf.mxu0
    %v254 = vadd.f32 %v93, %v253
    %v255 = vpop.f32.mrf.mxu0
    %256 = vmatprep.mubr.f32.mxu0 0.0
    %257 = vmatmul.mubr.f32.gmra.mxu0 %v143
    %v258 = vpop.f32.mrf.mxu0
    %v259 = vadd.f32 %v98, %v258
    %v260 = vpop.f32.mrf.mxu0
    %261 = vmatprep.mubr.f32.mxu0 0.0
    %262 = vmatmul.mubr.f32.gmra.mxu0 %v146
    %v263 = vpop.f32.mrf.mxu0
    %v264 = vadd.f32 %v103, %v263
    %v265 = vpop.f32.mrf.mxu0
    %266 = vmatprep.mubr.f32.mxu0 0.0
    %267 = vmatmul.mubr.f32.gmra.mxu0 %v149
    %v268 = vpop.f32.mrf.mxu0
    %v269 = vadd.f32 %v108, %v268
    %v270 = vpop.f32.mrf.mxu0
    %271 = vmatprep.mubr.f32.mxu0 0.0
    %272 = vmatmul.mubr.f32.gmra.mxu0 %v152
    %v273 = vpop.f32.mrf.mxu0
    %v274 = vadd.f32 %v113, %v273
    %v275 = vpop.f32.mrf.mxu0
    %276 = vmatprep.mubr.f32.mxu0 0.0
    %277 = vmatmul.mubr.f32.gmra.mxu0 %v155
    %v278 = vpop.f32.mrf.mxu0
    %v279 = vadd.f32 %v118, %v278
    %v280 = vpop.f32.mrf.mxu0
    %281 = vdwg.mxu0
    %v282 = vld [vmem:[%s4] sm:$0xff]
    %v283 = vld [vmem:[%s4 + $0x8] sm:$0xff]
    %v284 = vld [vmem:[%s4 + $0x10] sm:$0xff]
    %v285 = vld [vmem:[%s4 + $0x18] sm:$0xff]
    %v286 = vld [vmem:[%s4 + $0x20] sm:$0xff]
    %v287 = vld [vmem:[%s4 + $0x28] sm:$0xff]
    %v288 = vld [vmem:[%s4 + $0x30] sm:$0xff]
    %v289 = vld [vmem:[%s4 + $0x38] sm:$0xff]
    %v290 = vld [vmem:[%s4 + $0x40] sm:$0xff]
    %v291 = vld [vmem:[%s4 + $0x48] sm:$0xff]
    %v292 = vld [vmem:[%s4 + $0x50] sm:$0xff]
    %v293 = vld [vmem:[%s4 + $0x58] sm:$0xff]
    %v295 = vsel %vm120, %v282, 0
    %v298 = vsel %vm120, %v283, 0
    %v301 = vsel %vm120, %v284, 0
    %v304 = vsel %vm120, %v285, 0
    %v307 = vsel %vm120, %v286, 0
    %v310 = vsel %vm120, %v287, 0
    %v313 = vsel %vm120, %v288, 0
    %v316 = vsel %vm120, %v289, 0
    %v319 = vsel %vm120, %v290, 0
    %v322 = vsel %vm120, %v291, 0
    %v325 = vsel %vm120, %v292, 0
    %v328 = vsel %vm120, %v293, 0
    %330 = vmatprep.subr.mxu0 0.0
    %331 = vmatpush1.msra.mxu0 0.0
    %332 = vmatprep.subr.mxu0 0.0
    %333 = vmatpush1.msra.mxu0 0.0
    %334 = vmatprep.subr.mxu0 0.0
    %335 = vmatpush1.msra.mxu0 0.0
    %336 = vmatprep.subr.mxu0 0.0
    %337 = vmatpush1.msra.mxu0 0.0
    %338 = vmatprep.subr.mxu0 0.0
    %339 = vmatpush1.msra.mxu0 0.0
    %340 = vmatprep.subr.mxu0 0.0
    %341 = vmatpush1.msra.mxu0 0.0
    %342 = vmatprep.subr.mxu0 0.0
    %343 = vmatpush1.msra.mxu0 0.0
    %344 = vmatprep.subr.mxu0 0.0
    %345 = vmatpush1.msra.mxu0 0.0
    %346 = vmatprep.subr.mxu0 0.0
    %347 = vmatpush1.msra.mxu0 0.0
    %348 = vmatprep.subr.mxu0 0.0
    %349 = vmatpush1.msra.mxu0 0.0
    %350 = vmatprep.subr.mxu0 0.0
    %351 = vmatpush1.msra.mxu0 0.0
    %352 = vmatprep.subr.mxu0 0.0
    %353 = vmatpush1.msra.mxu0 0.0
    %354 = vmatprep.subr.mxu0 0.0
    %355 = vmatpush1.msra.mxu0 %v34
    %356 = vmatprep.subr.mxu0 0.0
    %357 = vmatpush1.msra.mxu0 %v33
    %358 = vmatprep.subr.mxu0 0.0
    %359 = vmatpush1.msra.mxu0 %v32
    %360 = vmatprep.subr.mxu0 0.0
    %361 = vmatpush1.msra.mxu0 %v31
    %362 = vmatprep.subr.mxu0 0.0
    %363 = vmatpush2.msra.mxu0 0.0
    %364 = vmatprep.subr.mxu0 0.0
    %365 = vmatpush2.msra.mxu0 0.0
    %366 = vmatprep.subr.mxu0 0.0
    %367 = vmatpush2.msra.mxu0 0.0
    %368 = vmatprep.subr.mxu0 0.0
    %369 = vmatpush2.msra.mxu0 0.0
    %370 = vmatprep.subr.mxu0 0.0
    %371 = vmatpush2.msra.mxu0 0.0
    %372 = vmatprep.subr.mxu0 0.0
    %373 = vmatpush2.msra.mxu0 0.0
    %374 = vmatprep.subr.mxu0 0.0
    %375 = vmatpush2.msra.mxu0 0.0
    %376 = vmatprep.subr.mxu0 0.0
    %377 = vmatpush2.msra.mxu0 0.0
    %378 = vmatprep.subr.mxu0 0.0
    %379 = vmatpush2.msra.mxu0 0.0
    %380 = vmatprep.subr.mxu0 0.0
    %381 = vmatpush2.msra.mxu0 0.0
    %382 = vmatprep.subr.mxu0 0.0
    %383 = vmatpush2.msra.mxu0 0.0
    %384 = vmatprep.subr.mxu0 0.0
    %385 = vmatpush2.msra.mxu0 0.0
    %386 = vmatprep.subr.mxu0 0.0
    %387 = vmatpush2.msra.mxu0 0.0
    %388 = vmatprep.subr.mxu0 0.0
    %389 = vmatpush2.msra.mxu0 0.0
    %390 = vmatprep.subr.mxu0 0.0
    %391 = vmatpush2.msra.mxu0 0.0
    %392 = vmatprep.subr.mxu0 0.0
    %393 = vmatpush2.msra.mxu0 0.0
    %394 = vmatprep.mubr.f32.mxu0 0.0
    %395 = vmatmul.mubr.f32.gmra.mxu0 %v295
    %v396 = vpop.f32.mrf.mxu0
    %v397 = vadd.f32 0.0, %v396
    %v398 = vpop.f32.mrf.mxu0
    %399 = vmatprep.mubr.f32.mxu0 0.0
    %400 = vmatmul.mubr.f32.gmra.mxu0 %v298
    %v401 = vpop.f32.mrf.mxu0
    %v402 = vadd.f32 0.0, %v401
    %v403 = vpop.f32.mrf.mxu0
    %404 = vmatprep.mubr.f32.mxu0 0.0
    %405 = vmatmul.mubr.f32.gmra.mxu0 %v301
    %v406 = vpop.f32.mrf.mxu0
    %v407 = vadd.f32 0.0, %v406
    %v408 = vpop.f32.mrf.mxu0
    %409 = vmatprep.mubr.f32.mxu0 0.0
    %410 = vmatmul.mubr.f32.gmra.mxu0 %v304
    %v411 = vpop.f32.mrf.mxu0
    %v412 = vadd.f32 0.0, %v411
    %v413 = vpop.f32.mrf.mxu0
    %414 = vmatprep.mubr.f32.mxu0 0.0
    %415 = vmatmul.mubr.f32.gmra.mxu0 %v307
    %v416 = vpop.f32.mrf.mxu0
    %v417 = vadd.f32 0.0, %v416
    %v418 = vpop.f32.mrf.mxu0
    %419 = vmatprep.mubr.f32.mxu0 0.0
    %420 = vmatmul.mubr.f32.gmra.mxu0 %v310
    %v421 = vpop.f32.mrf.mxu0
    %v422 = vadd.f32 0.0, %v421
    %v423 = vpop.f32.mrf.mxu0
    %424 = vmatprep.mubr.f32.mxu0 0.0
    %425 = vmatmul.mubr.f32.gmra.mxu0 %v313
    %v426 = vpop.f32.mrf.mxu0
    %v427 = vadd.f32 0.0, %v426
    %v428 = vpop.f32.mrf.mxu0
    %429 = vmatprep.mubr.f32.mxu0 0.0
    %430 = vmatmul.mubr.f32.gmra.mxu0 %v316
    %v431 = vpop.f32.mrf.mxu0
    %v432 = vadd.f32 0.0, %v431
    %v433 = vpop.f32.mrf.mxu0
    %434 = vmatprep.mubr.f32.mxu0 0.0
    %435 = vmatmul.mubr.f32.gmra.mxu0 %v319
    %v436 = vpop.f32.mrf.mxu0
    %v437 = vadd.f32 0.0, %v436
    %v438 = vpop.f32.mrf.mxu0
    %439 = vmatprep.mubr.f32.mxu0 0.0
    %440 = vmatmul.mubr.f32.gmra.mxu0 %v322
    %v441 = vpop.f32.mrf.mxu0
    %v442 = vadd.f32 0.0, %v441
    %v443 = vpop.f32.mrf.mxu0
    %444 = vmatprep.mubr.f32.mxu0 0.0
    %445 = vmatmul.mubr.f32.gmra.mxu0 %v325
    %v446 = vpop.f32.mrf.mxu0
    %v447 = vadd.f32 0.0, %v446
    %v448 = vpop.f32.mrf.mxu0
    %449 = vmatprep.mubr.f32.mxu0 0.0
    %450 = vmatmul.mubr.f32.gmra.mxu0 %v328
    %v451 = vpop.f32.mrf.mxu0
    %v452 = vadd.f32 0.0, %v451
    %v453 = vpop.f32.mrf.mxu0
    %454 = vdwg.mxu0
    %v455 = vadd.f32 %v224, %v397
    %v456 = vadd.f32 %v229, %v402
    %v457 = vadd.f32 %v234, %v407
    %v458 = vadd.f32 %v239, %v412
    %v459 = vxor.u32 %v455, 2147483648
    %v460 = vxor.u32 %v456, 2147483648
    %v461 = vxor.u32 %v457, 2147483648
    %v462 = vxor.u32 %v458, 2147483648
    %v463 = vmul.f32 %v459, 1.442695
    %v464 = vpow.pop %v463
    %v465 = vmul.f32 %v460, 1.442695
    %v466 = vpow.pop %v465
    %v467 = vmul.f32 %v461, 1.442695
    %v468 = vpow.pop %v467
    %v469 = vmul.f32 %v462, 1.442695
    %v470 = vpow.pop %v469
    %v471 = vadd.f32 %v464, 1.0
    %v472 = vadd.f32 %v466, 1.0
    %v473 = vadd.f32 %v468, 1.0
    %v474 = vadd.f32 %v470, 1.0
    %v475 = vrcp.pop %v471
    %v476 = vmul.f32 1.0, %v475
    %v477 = vrcp.pop %v472
    %v478 = vmul.f32 1.0, %v477
    %v479 = vrcp.pop %v473
    %v480 = vmul.f32 1.0, %v479
    %v481 = vrcp.pop %v474
    %v482 = vmul.f32 1.0, %v481
    %v483 = vadd.f32 %v244, %v417
    %v484 = vadd.f32 %v249, %v422
    %v485 = vadd.f32 %v254, %v427
    %v486 = vadd.f32 %v259, %v432
    %v487 = vxor.u32 %v483, 2147483648
    %v488 = vxor.u32 %v484, 2147483648
    %v489 = vxor.u32 %v485, 2147483648
    %v490 = vxor.u32 %v486, 2147483648
    %v491 = vmul.f32 %v487, 1.442695
    %v492 = vpow.pop %v491
    %v493 = vmul.f32 %v488, 1.442695
    %v494 = vpow.pop %v493
    %v495 = vmul.f32 %v489, 1.442695
    %v496 = vpow.pop %v495
    %v497 = vmul.f32 %v490, 1.442695
    %v498 = vpow.pop %v497
    %v499 = vadd.f32 %v492, 1.0
    %v500 = vadd.f32 %v494, 1.0
    %v501 = vadd.f32 %v496, 1.0
    %v502 = vadd.f32 %v498, 1.0
    %v503 = vrcp.pop %v499
    %v504 = vmul.f32 1.0, %v503
    %v505 = vrcp.pop %v500
    %v506 = vmul.f32 1.0, %v505
    %v507 = vrcp.pop %v501
    %v508 = vmul.f32 1.0, %v507
    %v509 = vrcp.pop %v502
    %v510 = vmul.f32 1.0, %v509
    %v511 = vld [vmem:[%s6] sm:$0xff]
    %v512 = vld [vmem:[%s6 + $0x8] sm:$0xff]
    %v513 = vld [vmem:[%s6 + $0x10] sm:$0xff]
    %v514 = vld [vmem:[%s6 + $0x18] sm:$0xff]
    %516 = vset.pattern.permute.xlu0 0
    %517 = vperm.xlu0 %516, %v511
    %v518 = vpop.permute.xlu0 %517
    %521 = vset.pattern.permute.xlu0 0
    %522 = vperm.xlu0 %521, %v512
    %v523 = vpop.permute.xlu0 %522
    %526 = vset.pattern.permute.xlu0 0
    %527 = vperm.xlu0 %526, %v513
    %v528 = vpop.permute.xlu0 %527
    %531 = vset.pattern.permute.xlu0 0
    %532 = vperm.xlu0 %531, %v514
    %v533 = vpop.permute.xlu0 %532
    %v535 = vadd.f32 %v437, %v518
    %v536 = vadd.f32 %v442, %v523
    %v537 = vadd.f32 %v447, %v528
    %v538 = vadd.f32 %v452, %v533
    %v539 = vmul.f32 %v476, %v535
    %v540 = vmul.f32 %v478, %v536
    %v541 = vmul.f32 %v480, %v537
    %v542 = vmul.f32 %v482, %v538
    %v543 = vadd.f32 %v264, %v539
    %v544 = vadd.f32 %v269, %v540
    %v545 = vadd.f32 %v274, %v541
    %v546 = vadd.f32 %v279, %v542
    %v547 = vtanh.pop %v543
    %v548 = vtanh.pop %v544
    %v549 = vtanh.pop %v545
    %v550 = vtanh.pop %v546
    %v552 = vlaneseq
    %v553 = vshrl.u32 %v552, 7
    %v554 = vsub.s32 0, %v553
    %v555 = vrot.slane %v35, %v554
    %v557 = vmul.f32 %v555, %v504
    %v558 = vmul.f32 %v555, %v506
    %v559 = vmul.f32 %v555, %v508
    %v560 = vmul.f32 %v555, %v510
    %v561 = vsub.f32 1.0, %v557
    %v562 = vsub.f32 1.0, %v558
    %v563 = vsub.f32 1.0, %v559
    %v564 = vsub.f32 1.0, %v560
    %v565 = vmul.f32 %v561, %v31
    %v566 = vmul.f32 %v562, %v32
    %v567 = vmul.f32 %v563, %v33
    %v568 = vmul.f32 %v564, %v34
    %v569 = vmul.f32 %v557, %v547
    %v570 = vmul.f32 %v558, %v548
    %v571 = vmul.f32 %v559, %v549
    %v572 = vmul.f32 %v560, %v550
    %v573 = vadd.f32 %v565, %v569
    %v574 = vadd.f32 %v566, %v570
    %v575 = vadd.f32 %v567, %v571
    %v576 = vadd.f32 %v568, %v572
    %577 = vst [vmem:[#allocation2] sm:$0xff] %v573
    %578 = vst [vmem:[#allocation2 + $0x8] sm:$0xff] %v574
    %579 = vst [vmem:[#allocation2 + $0x10] sm:$0xff] %v575
    %580 = vst [vmem:[#allocation2 + $0x18] sm:$0xff] %v576
    // Predicated region
    $region30: #{tpu_custom_call.1} parent=1 // pred_check
      _
    $region31: #{tpu_custom_call.1} parent=1 // pred_check_branch
      %582 = sbr.rel (0) target = $region33
    $region32: #{tpu_custom_call.1} parent=1 // pred_region
      %s584 = ssub.s32 512, 512
      %585 = vsyncadd [#allocation3], %s584
      %s586 = sshll.u32 [#allocation2], 4
      %s587 = int_to_ptr.vmem [resolvable:$true] %s586
      %592 = dma.vmem_to_hbm [thread:$0]  %s587, 512, %s7, [#allocation3], 128, 128, 8
    $region33: #{tpu_custom_call.1} parent=1 // pred_fallthru
      _
    // Predicated region
    $region34: #{tpu_custom_call.1} parent=1 // pred_check
      _
    $region35: #{tpu_custom_call.1} parent=1 // pred_check_branch
      %594 = sbr.rel (0) target = $region37
    $region36: #{tpu_custom_call.1} parent=1 // pred_region
      %595 = dma.done [#allocation3], 512
    $region37: #{tpu_custom_call.1} parent=1 // pred_fallthru
      _
    %596 = vsyncpa [#allocation3], 1

</llo_original>
